<compile_context>
chip_gen: v7x
topology: tpu7x:2x2x1
jax: 0.10.0
libtpu: 0.0.40
codegen_flags: <defaults>
</compile_context>

<pallas_src>
import functools

import jax
import jax.numpy as jnp
from jax import lax
from jax.experimental import pallas as pl
from jax.experimental.pallas import tpu as pltpu

# Module "parameters" (constructor args) — compile-time constants, no weights.
MULTITASK_MOD = (1, 1, 1)
ALPHA = 1.0
CONSISTENCY_AB = True
CONSISTENCY_AC = True


def _round_up(x, m):
    return ((x + m - 1) // m) * m


def _vmem_limit_bytes():
    """Per-generation scoped-VMEM request (v7x has 64 MiB physical per TC)."""
    try:
        cap = int(pltpu.get_tpu_info().vmem_capacity_bytes)
    except Exception:
        cap = 64 * 1024 * 1024
    return min(max(cap // 2, 8 * 1024 * 1024), 32 * 1024 * 1024)


def _pick_lane_tile(b_pad128, blocks, budget_bytes):
    """Lane-tile (multiple of 128) sized from the real padded VMEM footprint.

    `blocks` is a list of (rows, itemsize) for every input/output block; rows
    are padded to the dtype's sublane packing granularity and the whole
    footprint is doubled for double-buffering.
    """
    def sub_pad(rows, itemsize):
        g = max(8, 32 // max(itemsize, 1))      # f32 -> 8, bf16 -> 16, i8 -> 32
        return _round_up(max(int(rows), 1), g)

    per_lane = sum(sub_pad(r, isz) * isz for r, isz in blocks)
    bt = (budget_bytes // (2 * max(per_lane, 1))) // 128 * 128
    return int(max(128, min(bt, 4096, b_pad128)))


def _multitask_loss_kernel(mod, alpha, c_ab, c_ac, b_true, n_type,
                           bin_log_ref, bin_tgt_ref, type_log_ref, type_tgt_ref,
                           src_log_ref, src_lbl_ref, out_ref):
    i = pl.program_id(0)
    btl = out_ref.shape[1]                      # lane tile (batch chunk)

    inv_b = jnp.float32(1.0 / b_true)
    a_over_b = jnp.float32(alpha / b_true)

    def bce(x, y):                              # elementwise BCE-with-logits
        return jnp.maximum(x, 0.0) - x * y + jnp.log1p(jnp.exp(-jnp.abs(x)))

    contrib = jnp.zeros((1, btl), jnp.float32)  # fused per-lane loss vector

    if mod[0] == 1:
        bl = bin_log_ref[...].astype(jnp.float32)           # (1, btl)
        btg = bin_tgt_ref[...].astype(jnp.float32)
        contrib = contrib + bce(bl, btg) * inv_b
        bin_pos = bl > 0.0                  # round(sigmoid(x)) > 0  <=>  x > 0

    if mod[1] == 1:
        tl = type_log_ref[...].astype(jnp.float32)           # (T, btl)
        ttg = type_tgt_ref[...].astype(jnp.float32)
        contrib = contrib + (jnp.sum(bce(tl, ttg), axis=0, keepdims=True)
                             * jnp.float32(1.0 / (b_true * n_type)))
        type_any = jnp.max(tl, axis=0, keepdims=True) > 0.0  # any(round(sigm)>0)

    if mod[2] == 1:
        sl = src_log_ref[...].astype(jnp.float32)            # (C, btl)
        col_max = jnp.max(sl, axis=0, keepdims=True)          # shared: LSE + argmax
        lse = col_max + jnp.log(jnp.sum(jnp.exp(sl - col_max),
                                        axis=0, keepdims=True))
        lbl = src_lbl_ref[...]                                 # (1, btl) int32
        cls_ids = lax.broadcasted_iota(jnp.int32, sl.shape, 0)
        tgt_logit = jnp.sum(jnp.where(cls_ids == lbl, sl, 0.0),
                            axis=0, keepdims=True)
        contrib = contrib + (lse - tgt_logit) * inv_b
        # torch.argmax(dim=1) != 0  <=>  logits[:, 0] strictly below the max
        # (first-index tie-break, identical semantics to torch/jnp argmax).
        src_nonzero = sl[0:1, :] < col_max

    if mod[0] == 1 and mod[1] == 1 and c_ab:
        contrib = contrib + (jnp.logical_xor(bin_pos, type_any)
                             .astype(jnp.float32) * a_over_b)
    if mod[0] == 1 and mod[2] == 1 and c_ac:
        contrib = contrib + (jnp.logical_xor(bin_pos, src_nonzero)
                             .astype(jnp.float32) * a_over_b)
    if mod[0] == 0 and mod[1] == 1 and mod[2] == 1:
        contrib = contrib + (jnp.logical_xor(type_any, src_nonzero)
                             .astype(jnp.float32) * a_over_b)

    # Only the last tile can be partial; masking the fused (1, btl) vector is a
    # single iota/compare/multiply, so it is applied unconditionally.
    lane_ids = lax.broadcasted_iota(jnp.int32, (1, btl), 1)
    lane_mask = (lane_ids < (b_true - i * btl)).astype(jnp.float32)
    out_ref[...] = contrib * lane_mask


def multitask_loss_no_redundancy(y_pred_binary, y_pred_type, y_pred_source,
                                 y_true_binary, y_true_type, y_true_source,
                                 multitask_mod=MULTITASK_MOD, alpha=ALPHA,
                                 consistencyAB=CONSISTENCY_AB,
                                 consistencyAC=CONSISTENCY_AC):
    mod = tuple(int(m) for m in multitask_mod)
    assert mod != (0, 0, 0), "At least one modality must be active"

    B = y_pred_binary.shape[0]
    T = y_pred_type.shape[1]
    C = y_pred_source.shape[1]

    # Lane-dense layout: batch on lanes (last dim), classes on sublanes.
    bin_log = y_pred_binary.reshape(1, B)
    bin_tgt = y_true_binary.reshape(1, B)
    type_log = jnp.transpose(y_pred_type)        # (T, B)
    type_tgt = jnp.transpose(y_true_type)
    src_log = jnp.transpose(y_pred_source)       # (C, B)
    src_lbl = y_true_source.reshape(1, B).astype(jnp.int32)

    vmem_limit = _vmem_limit_bytes()
    isz = lambda a: jnp.dtype(a.dtype).itemsize
    blocks = [(1, isz(bin_log)), (1, isz(bin_tgt)),
              (T, isz(type_log)), (T, isz(type_tgt)),
              (C, isz(src_log)),
              (1, 4),                            # int32 labels
              (1, 4)]                            # f32 output block
    btl = _pick_lane_tile(_round_up(B, 128), blocks, vmem_limit // 2)

    b_pad = _round_up(B, btl)                    # grid divides exactly
    if b_pad != B:
        padw = ((0, 0), (0, b_pad - B))
        bin_log = jnp.pad(bin_log, padw)
        bin_tgt = jnp.pad(bin_tgt, padw)
        type_log = jnp.pad(type_log, padw)
        type_tgt = jnp.pad(type_tgt, padw)
        src_log = jnp.pad(src_log, padw)
        src_lbl = jnp.pad(src_lbl, padw)

    grid = (b_pad // btl,)
    lane_map = lambda i: (0, i)

    kernel = functools.partial(
        _multitask_loss_kernel, mod, float(alpha),
        bool(consistencyAB), bool(consistencyAC), int(B), int(T))

    partial_rows = pl.pallas_call(
        kernel,
        out_shape=jax.ShapeDtypeStruct((1, b_pad), jnp.float32),
        grid=grid,
        in_specs=[
            pl.BlockSpec((1, btl), lane_map),
            pl.BlockSpec((1, btl), lane_map),
            pl.BlockSpec((T, btl), lane_map),
            pl.BlockSpec((T, btl), lane_map),
            pl.BlockSpec((C, btl), lane_map),
            pl.BlockSpec((1, btl), lane_map),
        ],
        out_specs=pl.BlockSpec((1, btl), lane_map),
        compiler_params=pltpu.CompilerParams(
            dimension_semantics=("parallel",),   # disjoint outputs -> megacore OK
            vmem_limit_bytes=vmem_limit),
    )(bin_log, bin_tgt, type_log, type_tgt, src_log, src_lbl)

    # Per-lane contributions are already weighted; the loss is their sum.
    # TODO(synk): for very large B a tiny second Pallas kernel could do this
    # final reduction too; left to XLA since the array is only (1, B_pad).
    return jnp.sum(partial_rows)


def _reference(y_pred_binary, y_pred_type, y_pred_source,
               y_true_binary, y_true_type, y_true_source,
               multitask_mod=MULTITASK_MOD, alpha=ALPHA,
               consistencyAB=CONSISTENCY_AB, consistencyAC=CONSISTENCY_AC):
    """Plain-JAX mirror of the PyTorch forward (for correctness check)."""
    loss = 0.0

    def bce(x, y):
        per = jnp.maximum(x, 0.0) - x * y + jnp.log1p(jnp.exp(-jnp.abs(x)))
        return jnp.mean(per)

    if multitask_mod[0] == 1:
        loss += bce(y_pred_binary, y_true_binary)
    if multitask_mod[1] == 1:
        loss += bce(y_pred_type, y_true_type)
    if multitask_mod[2] == 1:
        logp = jax.nn.log_softmax(y_pred_source, axis=1)
        loss += -jnp.mean(jnp.take_along_axis(
            logp, y_true_source[:, None], axis=1))
    bin_cls = jnp.round(jax.nn.sigmoid(y_pred_binary))
    type_cls = jnp.any(jnp.round(jax.nn.sigmoid(y_pred_type)) > 0, axis=1)
    src_cls = jnp.argmax(y_pred_source, axis=1)
    if multitask_mod[0] == 1 and multitask_mod[1] == 1 and consistencyAB:
        loss += alpha * jnp.mean(
            jnp.logical_xor(bin_cls > 0, type_cls).astype(jnp.float32))
    if multitask_mod[0] == 1 and multitask_mod[2] == 1 and consistencyAC:
        loss += alpha * jnp.mean(
            jnp.logical_xor(bin_cls > 0, src_cls > 0).astype(jnp.float32))
    if multitask_mod[0] == 0 and multitask_mod[1] == 1 and multitask_mod[2] == 1:
        loss += alpha * jnp.mean(
            jnp.logical_xor(type_cls, src_cls > 0).astype(jnp.float32))
    return loss


def _make_inputs(key, B, T, C):
    k1, k2, k3, k4, k5, k6 = jax.random.split(key, 6)
    return (jax.random.normal(k1, (B,), dtype=jnp.float32),
            jax.random.normal(k2, (B, T), dtype=jnp.float32),
            jax.random.normal(k3, (B, C), dtype=jnp.float32),
            jax.random.bernoulli(k4, 0.5, (B,)).astype(jnp.float32),
            jax.random.bernoulli(k5, 0.5, (B, T)).astype(jnp.float32),
            jax.random.randint(k6, (B,), 0, C))


if __name__ == "__main__":
    key = jax.random.PRNGKey(0)
    configs = [
        # (B, T, C, multitask_mod)
        (8, 4, 6, (1, 1, 1)),       # tiny batch, all heads
        (13, 5, 7, (0, 1, 1)),      # padding/masking + type<->source branch
        (4500, 6, 9, (1, 1, 1)),    # multi-tile grid + partial last tile
    ]
    for idx, (B, T, C, mod) in enumerate(configs):
        key, sub = jax.random.split(key)
        args = _make_inputs(sub, B, T, C)

        loss = jax.block_until_ready(
            multitask_loss_no_redundancy(*args, multitask_mod=mod))
        ref = jax.block_until_ready(_reference(*args, multitask_mod=mod))

        assert jnp.isfinite(loss), f"config {idx}: non-finite loss"
        assert abs(float(loss) - float(ref)) < 1e-3, (idx, float(loss), float(ref))
    print("KERNEL_OK")
</pallas_src>

<mosaic_0001>
module attributes {stable_mosaic.version = 11 : i64} {
  func.func @_multitask_loss_kernel(%arg0: i32, %arg1: memref<1x128xf32, #tpu.memory_space<vmem>>, %arg2: memref<1x128xf32, #tpu.memory_space<vmem>>, %arg3: memref<4x128xf32, #tpu.memory_space<vmem>>, %arg4: memref<4x128xf32, #tpu.memory_space<vmem>>, %arg5: memref<6x128xf32, #tpu.memory_space<vmem>>, %arg6: memref<1x128xi32, #tpu.memory_space<vmem>>, %arg7: memref<1x128xf32, #tpu.memory_space<vmem>>) attributes {dimension_semantics = [#tpu.dimension_semantics<parallel>], iteration_bounds = array<i64: 1>, scalar_prefetch = 0 : i64, scratch_operands = 0 : i64, tpu.core_type = #tpu.core_type<tc>, window_params = [{transform_indices = @transform_0, window_bounds = array<i64: 1, 128>}, {transform_indices = @transform_1, window_bounds = array<i64: 1, 128>}, {transform_indices = @transform_2, window_bounds = array<i64: 4, 128>}, {transform_indices = @transform_3, window_bounds = array<i64: 4, 128>}, {transform_indices = @transform_4, window_bounds = array<i64: 6, 128>}, {transform_indices = @transform_5, window_bounds = array<i64: 1, 128>}, {transform_indices = @transform_6, window_bounds = array<i64: 1, 128>}]} {
    %cst = arith.constant 0.000000e+00 : f32
    %0 = vector.broadcast %cst : f32 to vector<1x128xf32>
    %c0 = arith.constant 0 : index
    %c0_0 = arith.constant 0 : index
    %1 = vector.load %arg1[%c0, %c0_0] : memref<1x128xf32, #tpu.memory_space<vmem>>, vector<1x128xf32>
    %c0_1 = arith.constant 0 : index
    %c0_2 = arith.constant 0 : index
    %2 = vector.load %arg2[%c0_1, %c0_2] : memref<1x128xf32, #tpu.memory_space<vmem>>, vector<1x128xf32>
    %cst_3 = arith.constant 0.000000e+00 : f32
    %3 = vector.broadcast %cst_3 : f32 to vector<1x128xf32>
    %4 = arith.maximumf %1, %3 : vector<1x128xf32>
    %5 = arith.mulf %1, %2 : vector<1x128xf32>
    %6 = arith.subf %4, %5 : vector<1x128xf32>
    %7 = math.absf %1 : vector<1x128xf32>
    %cst_4 = arith.constant 0.000000e+00 : f32
    %8 = vector.broadcast %cst_4 : f32 to vector<1x128xf32>
    %9 = arith.subf %8, %7 : vector<1x128xf32>
    %10 = math.exp %9 : vector<1x128xf32>
    %11 = math.log1p %10 : vector<1x128xf32>
    %12 = arith.addf %6, %11 : vector<1x128xf32>
    %cst_5 = arith.constant 1.250000e-01 : f32
    %13 = vector.broadcast %cst_5 : f32 to vector<1x128xf32>
    %14 = arith.mulf %12, %13 : vector<1x128xf32>
    %15 = arith.addf %0, %14 : vector<1x128xf32>
    %cst_6 = arith.constant 0.000000e+00 : f32
    %16 = vector.broadcast %cst_6 : f32 to vector<1x128xf32>
    %17 = arith.cmpf ogt, %1, %16 : vector<1x128xf32>
    %c0_7 = arith.constant 0 : index
    %c0_8 = arith.constant 0 : index
    %18 = vector.load %arg3[%c0_7, %c0_8] : memref<4x128xf32, #tpu.memory_space<vmem>>, vector<4x128xf32>
    %c0_9 = arith.constant 0 : index
    %c0_10 = arith.constant 0 : index
    %19 = vector.load %arg4[%c0_9, %c0_10] : memref<4x128xf32, #tpu.memory_space<vmem>>, vector<4x128xf32>
    %cst_11 = arith.constant 0.000000e+00 : f32
    %20 = vector.broadcast %cst_11 : f32 to vector<4x128xf32>
    %21 = arith.maximumf %18, %20 : vector<4x128xf32>
    %22 = arith.mulf %18, %19 : vector<4x128xf32>
    %23 = arith.subf %21, %22 : vector<4x128xf32>
    %24 = math.absf %18 : vector<4x128xf32>
    %cst_12 = arith.constant 0.000000e+00 : f32
    %25 = vector.broadcast %cst_12 : f32 to vector<4x128xf32>
    %26 = arith.subf %25, %24 : vector<4x128xf32>
    %27 = math.exp %26 : vector<4x128xf32>
    %28 = math.log1p %27 : vector<4x128xf32>
    %29 = arith.addf %23, %28 : vector<4x128xf32>
    %cst_13 = arith.constant dense<0.000000e+00> : vector<128xf32>
    %30 = vector.multi_reduction <add>, %29, %cst_13 [0] : vector<4x128xf32> to vector<128xf32>
    %31 = vector.shape_cast %30 : vector<128xf32> to vector<1x128xf32>
    %cst_14 = arith.constant 3.125000e-02 : f32
    %32 = vector.broadcast %cst_14 : f32 to vector<1x128xf32>
    %33 = arith.mulf %31, %32 : vector<1x128xf32>
    %34 = arith.addf %15, %33 : vector<1x128xf32>
    %cst_15 = arith.constant dense<0xFF800000> : vector<128xf32>
    %35 = vector.multi_reduction <maximumf>, %18, %cst_15 [0] : vector<4x128xf32> to vector<128xf32>
    %36 = vector.shape_cast %35 : vector<128xf32> to vector<1x128xf32>
    %cst_16 = arith.constant 0.000000e+00 : f32
    %37 = vector.broadcast %cst_16 : f32 to vector<1x128xf32>
    %38 = arith.cmpf ogt, %36, %37 : vector<1x128xf32>
    %c0_17 = arith.constant 0 : index
    %c0_18 = arith.constant 0 : index
    %39 = vector.load %arg5[%c0_17, %c0_18] : memref<6x128xf32, #tpu.memory_space<vmem>>, vector<6x128xf32>
    %cst_19 = arith.constant dense<0xFF800000> : vector<128xf32>
    %40 = vector.multi_reduction <maximumf>, %39, %cst_19 [0] : vector<6x128xf32> to vector<128xf32>
    %41 = vector.shape_cast %40 : vector<128xf32> to vector<1x128xf32>
    %42 = vector.broadcast %41 : vector<1x128xf32> to vector<6x128xf32>
    %43 = arith.subf %39, %42 : vector<6x128xf32>
    %44 = math.exp %43 : vector<6x128xf32>
    %cst_20 = arith.constant dense<0.000000e+00> : vector<128xf32>
    %45 = vector.multi_reduction <add>, %44, %cst_20 [0] : vector<6x128xf32> to vector<128xf32>
    %46 = vector.shape_cast %45 : vector<128xf32> to vector<1x128xf32>
    %47 = math.log %46 : vector<1x128xf32>
    %48 = arith.addf %41, %47 : vector<1x128xf32>
    %c0_21 = arith.constant 0 : index
    %c0_22 = arith.constant 0 : index
    %49 = vector.load %arg6[%c0_21, %c0_22] : memref<1x128xi32, #tpu.memory_space<vmem>>, vector<1x128xi32>
    %50 = tpu.iota {dimensions = array<i32: 0>} : vector<6x128xi32>
    %51 = vector.broadcast %49 : vector<1x128xi32> to vector<6x128xi32>
    %52 = arith.cmpi eq, %50, %51 : vector<6x128xi32>
    %cst_23 = arith.constant 0.000000e+00 : f32
    %53 = vector.broadcast %cst_23 : f32 to vector<6x128xf32>
    %54 = arith.select %52, %39, %53 : vector<6x128xi1>, vector<6x128xf32>
    %cst_24 = arith.constant dense<0.000000e+00> : vector<128xf32>
    %55 = vector.multi_reduction <add>, %54, %cst_24 [0] : vector<6x128xf32> to vector<128xf32>
    %56 = vector.shape_cast %55 : vector<128xf32> to vector<1x128xf32>
    %57 = arith.subf %48, %56 : vector<1x128xf32>
    %cst_25 = arith.constant 1.250000e-01 : f32
    %58 = vector.broadcast %cst_25 : f32 to vector<1x128xf32>
    %59 = arith.mulf %57, %58 : vector<1x128xf32>
    %60 = arith.addf %34, %59 : vector<1x128xf32>
    %61 = vector.extract_strided_slice %39 {offsets = [0, 0], sizes = [1, 128], strides = [1, 1]} : vector<6x128xf32> to vector<1x128xf32>
    %62 = arith.cmpf olt, %61, %41 : vector<1x128xf32>
    %63 = arith.xori %17, %38 : vector<1x128xi1>
    %64 = arith.extui %63 : vector<1x128xi1> to vector<1x128xi32>
    %65 = arith.sitofp %64 : vector<1x128xi32> to vector<1x128xf32>
    %cst_26 = arith.constant 1.250000e-01 : f32
    %66 = vector.broadcast %cst_26 : f32 to vector<1x128xf32>
    %67 = arith.mulf %65, %66 : vector<1x128xf32>
    %68 = arith.addf %60, %67 : vector<1x128xf32>
    %69 = arith.xori %17, %62 : vector<1x128xi1>
    %70 = arith.extui %69 : vector<1x128xi1> to vector<1x128xi32>
    %71 = arith.sitofp %70 : vector<1x128xi32> to vector<1x128xf32>
    %cst_27 = arith.constant 1.250000e-01 : f32
    %72 = vector.broadcast %cst_27 : f32 to vector<1x128xf32>
    %73 = arith.mulf %71, %72 : vector<1x128xf32>
    %74 = arith.addf %68, %73 : vector<1x128xf32>
    %75 = tpu.iota {dimensions = array<i32: 1>} : vector<1x128xi32>
    %c128_i32 = arith.constant 128 : i32
    %76 = arith.muli %arg0, %c128_i32 : i32
    %c8_i32 = arith.constant 8 : i32
    %77 = arith.subi %c8_i32, %76 : i32
    %78 = vector.broadcast %77 : i32 to vector<1x128xi32>
    %79 = arith.cmpi slt, %75, %78 : vector<1x128xi32>
    %80 = arith.extui %79 : vector<1x128xi1> to vector<1x128xi32>
    %81 = arith.sitofp %80 : vector<1x128xi32> to vector<1x128xf32>
    %82 = arith.mulf %74, %81 : vector<1x128xf32>
    %c0_28 = arith.constant 0 : index
    %c0_29 = arith.constant 0 : index
    %83 = vector.load %arg7[%c0_28, %c0_29] : memref<1x128xf32, #tpu.memory_space<vmem>>, vector<1x128xf32>
    tpu.vector_store %arg7[%c0_28, %c0_29], %82 {strides = array<i32>} : memref<1x128xf32, #tpu.memory_space<vmem>>, vector<1x128xf32>,
    return
  }
  func.func @transform_0(%arg0: i32) -> (i32, i32) {
    %c0_i32 = arith.constant 0 : i32
    %c0_i32_0 = arith.constant 0 : i32
    return %c0_i32, %arg0 : i32, i32
  }
  func.func @transform_1(%arg0: i32) -> (i32, i32) {
    %c0_i32 = arith.constant 0 : i32
    %c0_i32_0 = arith.constant 0 : i32
    return %c0_i32, %arg0 : i32, i32
  }
  func.func @transform_2(%arg0: i32) -> (i32, i32) {
    %c0_i32 = arith.constant 0 : i32
    %c0_i32_0 = arith.constant 0 : i32
    return %c0_i32, %arg0 : i32, i32
  }
  func.func @transform_3(%arg0: i32) -> (i32, i32) {
    %c0_i32 = arith.constant 0 : i32
    %c0_i32_0 = arith.constant 0 : i32
    return %c0_i32, %arg0 : i32, i32
  }
  func.func @transform_4(%arg0: i32) -> (i32, i32) {
    %c0_i32 = arith.constant 0 : i32
    %c0_i32_0 = arith.constant 0 : i32
    return %c0_i32, %arg0 : i32, i32
  }
  func.func @transform_5(%arg0: i32) -> (i32, i32) {
    %c0_i32 = arith.constant 0 : i32
    %c0_i32_0 = arith.constant 0 : i32
    return %c0_i32, %arg0 : i32, i32
  }
  func.func @transform_6(%arg0: i32) -> (i32, i32) {
    %c0_i32 = arith.constant 0 : i32
    %c0_i32_0 = arith.constant 0 : i32
    return %c0_i32, %arg0 : i32, i32
  }
}

</mosaic_0001>

<llo_original>
// kernel: tpu_custom_call.1
$region0: #{tpu_custom_call.1}
  #allocation0 [shape = 'u32[]', space=smem, size = 0x4, offset = 0x4, fixed_abs, tag = 'smem constant byte address 0x4 - core index']
  #allocation1 [shape = 'u32[144,128]{1,0:T(1,128)}', space=vmem, size = 0x12000, scoped, tag = 'internal scratch']
  %s0 = inlined_call_operand.hbm [shape: f32[1,128], index: 0, kind: input, shape index: {}]
  %s1 = inlined_call_operand.vmem [shape: f32[1,128], index: 1, kind: input, shape index: {}]
  %s2 = inlined_call_operand.vmem [shape: f32[4,128], index: 2, kind: input, shape index: {}]
  %s3 = inlined_call_operand.hbm [shape: f32[4,128], index: 3, kind: input, shape index: {}]
  %s4 = inlined_call_operand.vmem [shape: f32[6,128], index: 4, kind: input, shape index: {}]
  %s5 = inlined_call_operand.vmem [shape: s32[1,128], index: 5, kind: input, shape index: {}]
  %s6 = inlined_call_operand.hbm [shape: f32[1,128], index: 6, kind: output, shape index: {}]
  %s7 = sld [smem:[#allocation0]]
  $region42: #{tpu_custom_call.1} parent=0
    _
  %s9 = ssub.s32 1, %s7
  %s10 = scalar_select 0, %s9, %s7
  $region1: #{tpu_custom_call.1} parent=0
    #allocation2 [shape = 'u8[512]{0}', space=vmem, size = 0x400, scoped, tag = 'input window, operand 0, single buffered']
    #allocation3 [shape = 's32[1]{0}', space=sflag, size = 0x4, scoped, tag = 'scoped memory for tpu_custom_call.1']
    #allocation4 [shape = 's32[1]{0}', space=sflag, size = 0x4, scoped, tag = 'scoped memory for tpu_custom_call.1']
    #allocation5 [shape = 'u8[2048]{0}', space=vmem, size = 0x800, scoped, tag = 'input window, operand 3, single buffered']
    #allocation6 [shape = 's32[1]{0}', space=sflag, size = 0x4, scoped, tag = 'scoped memory for tpu_custom_call.1']
    #allocation7 [shape = 'u8[512]{0}', space=vmem, size = 0x400, scoped, tag = 'output window, operand 0, single buffered']
    %11 = vsyncpa [#allocation3], 0
    %12 = vsyncpa [#allocation6], 0
    %13 = vsyncpa [#allocation4], 0
    // Predicated region
    $region2: #{tpu_custom_call.1} parent=1 // pred_check
      _
    $region3: #{tpu_custom_call.1} parent=1 // pred_check_branch
      %15 = sbr.rel (0) target = $region5
    $region4: #{tpu_custom_call.1} parent=1 // pred_region
      %s17 = ssub.s32 16, 16
      %18 = vsyncadd [#allocation3], %s17
      %s20 = sshll.u32 [#allocation2], 4
      %s21 = int_to_ptr.vmem [resolvable:$true] %s20
      %23 = dma.hbm_to_vmem [thread:$0]  %s0, 16, %s21, [#allocation3]
    $region5: #{tpu_custom_call.1} parent=1 // pred_fallthru
      _
    // Predicated region
    $region6: #{tpu_custom_call.1} parent=1 // pred_check
      _
    $region7: #{tpu_custom_call.1} parent=1 // pred_check_branch
      %25 = sbr.rel (0) target = $region9
    $region8: #{tpu_custom_call.1} parent=1 // pred_region
      _
    $region9: #{tpu_custom_call.1} parent=1 // pred_fallthru
      _
    // Predicated region
    $region10: #{tpu_custom_call.1} parent=1 // pred_check
      _
    $region11: #{tpu_custom_call.1} parent=1 // pred_check_branch
      %27 = sbr.rel (0) target = $region13
    $region12: #{tpu_custom_call.1} parent=1 // pred_region
      _
    $region13: #{tpu_custom_call.1} parent=1 // pred_fallthru
      _
    // Predicated region
    $region14: #{tpu_custom_call.1} parent=1 // pred_check
      _
    $region15: #{tpu_custom_call.1} parent=1 // pred_check_branch
      %29 = sbr.rel (0) target = $region17
    $region16: #{tpu_custom_call.1} parent=1 // pred_region
      %s31 = ssub.s32 64, 64
      %32 = vsyncadd [#allocation6], %s31
      %s34 = sshll.u32 [#allocation5], 4
      %s35 = int_to_ptr.vmem [resolvable:$true] %s34
      %37 = dma.hbm_to_vmem [thread:$0]  %s3, 64, %s35, [#allocation6]
    $region17: #{tpu_custom_call.1} parent=1 // pred_fallthru
      _
    // Predicated region
    $region18: #{tpu_custom_call.1} parent=1 // pred_check
      _
    $region19: #{tpu_custom_call.1} parent=1 // pred_check_branch
      %39 = sbr.rel (0) target = $region21
    $region20: #{tpu_custom_call.1} parent=1 // pred_region
      _
    $region21: #{tpu_custom_call.1} parent=1 // pred_fallthru
      _
    // Predicated region
    $region22: #{tpu_custom_call.1} parent=1 // pred_check
      _
    $region23: #{tpu_custom_call.1} parent=1 // pred_check_branch
      %41 = sbr.rel (0) target = $region25
    $region24: #{tpu_custom_call.1} parent=1 // pred_region
      _
    $region25: #{tpu_custom_call.1} parent=1 // pred_fallthru
      _
    // Predicated region
    $region26: #{tpu_custom_call.1} parent=1 // pred_check
      _
    $region27: #{tpu_custom_call.1} parent=1 // pred_check_branch
      %43 = sbr.rel (0) target = $region29
    $region28: #{tpu_custom_call.1} parent=1 // pred_region
      %44 = dma.done [#allocation3], 16
    $region29: #{tpu_custom_call.1} parent=1 // pred_fallthru
      _
    // Predicated region
    $region30: #{tpu_custom_call.1} parent=1 // pred_check
      _
    $region31: #{tpu_custom_call.1} parent=1 // pred_check_branch
      %46 = sbr.rel (0) target = $region33
    $region32: #{tpu_custom_call.1} parent=1 // pred_region
      %47 = dma.done [#allocation6], 64
    $region33: #{tpu_custom_call.1} parent=1 // pred_fallthru
      _
    %v48 = vld [vmem:[#allocation2] sm:$0x1]
    %v49 = vld [vmem:[%s1] sm:$0x1]
    %v50 = vmax.f32 %v48, 0.0
    %v51 = vmul.f32 %v48, %v49
    %v52 = vsub.f32 %v50, %v51
    %v53 = vand.u32 2147483647, %v48
    %v54 = vsub.f32 0.0, %v53
    %v55 = vmul.f32 %v54, 1.442695
    %v56 = vpow.pop %v55
    %v57 = vadd.f32 %v56, 1.0
    %v58 = vlog2.pop %v57
    %v59 = vmul.f32 %v58, 0.6931472
    %v60 = vmul.f32 -0.5, %v56
    %v61 = vadd.f32 %v60, 1.0
    %v62 = vmul.f32 %v61, %v56
    %v63 = vand.u32 2147483647, %v56
    %vm64 = vcmp.lt.f32.partialorder %v63, 0.0004427343
    %v65 = vsel %vm64, %v62, %v59
    %v66 = vadd.f32 %v52, %v65
    %v67 = vmul.f32 %v66, 0.125
    %v68 = vadd.f32 %v67, 0.0
    %vm69 = vcmp.gt.f32.partialorder %v48, 0.0
    %v70 = vld [vmem:[%s2] sm:$0xf]
    %v71 = vld [vmem:[#allocation5] sm:$0xf]
    %v72 = vmax.f32 %v70, 0.0
    %v73 = vmul.f32 %v70, %v71
    %v74 = vsub.f32 %v72, %v73
    %v75 = vand.u32 2147483647, %v70
    %v76 = vsub.f32 0.0, %v75
    %v77 = vmul.f32 %v76, 1.442695
    %v78 = vpow.pop %v77
    %v79 = vadd.f32 %v78, 1.0
    %v80 = vlog2.pop %v79
    %v81 = vmul.f32 %v80, 0.6931472
    %v82 = vmul.f32 -0.5, %v78
    %v83 = vadd.f32 %v82, 1.0
    %v84 = vmul.f32 %v83, %v78
    %v85 = vand.u32 2147483647, %v78
    %vm86 = vcmp.lt.f32.partialorder %v85, 0.0004427343
    %v87 = vsel %vm86, %v84, %v81
    %v88 = vadd.f32 %v74, %v87
    %vm89 = vcmask 1043456
    %v90 = vsel %vm89, %v88, 0.0
    %v91 = vrot.slane %v90, 4
    %v92 = vadd.f32 %v90, %v91
    %v93 = vrot.slane %v92, 2
    %v94 = vadd.f32 %v92, %v93
    %v95 = vrot.slane %v94, 1
    %v96 = vadd.f32 %v94, %v95
    %v97 = vmul.f32 %v96, 0.03125
    %v98 = vadd.f32 %v68, %v97
    %v99 = vsel %vm89, %v70, -inf
    %v100 = vrot.slane %v99, 4
    %v101 = vmax.f32 %v99, %v100
    %v102 = vrot.slane %v101, 2
    %v103 = vmax.f32 %v101, %v102
    %v104 = vrot.slane %v103, 1
    %v105 = vmax.f32 %v103, %v104
    %vm106 = vcmp.gt.f32.partialorder %v105, 0.0
    %v107 = vld [vmem:[%s4] sm:$0x3f]
    %vm108 = vcmask 1045504
    %v109 = vsel %vm108, %v107, -inf
    %v110 = vrot.slane %v109, 4
    %v111 = vmax.f32 %v109, %v110
    %v112 = vrot.slane %v111, 2
    %v113 = vmax.f32 %v111, %v112
    %v114 = vrot.slane %v113, 1
    %v115 = vmax.f32 %v113, %v114
    %v116 = vsub.f32 %v107, %v115
    %v117 = vmul.f32 %v116, 1.442695
    %v118 = vpow.pop %v117
    %v119 = vsel %vm108, %v118, 0.0
    %v120 = vrot.slane %v119, 4
    %v121 = vadd.f32 %v119, %v120
    %v122 = vrot.slane %v121, 2
    %v123 = vadd.f32 %v121, %v122
    %v124 = vrot.slane %v123, 1
    %v125 = vadd.f32 %v123, %v124
    %v126 = vlog2.pop %v125
    %v127 = vmul.f32 %v126, 0.6931472
    %v128 = vadd.f32 %v115, %v127
    %v129 = vld [vmem:[%s5] sm:$0x1]
    %v130 = vlaneseq
    %v131 = vshrl.u32 %v130, 7
    %v132 = vlaneseq
    %v133 = vshrl.u32 %v132, 7
    %v134 = vsub.s32 0, %v133
    %v135 = vrot.slane %v129, %v134
    %vm136 = vcmp.eq.s32.totalorder %v131, %v135
    %v137 = vsel %vm136, %v107, 0.0
    %v138 = vsel %vm108, %v137, 0.0
    %v139 = vrot.slane %v138, 4
    %v140 = vadd.f32 %v138, %v139
    %v141 = vrot.slane %v140, 2
    %v142 = vadd.f32 %v140, %v141
    %v143 = vrot.slane %v142, 1
    %v144 = vadd.f32 %v142, %v143
    %v145 = vsub.f32 %v128, %v144
    %v146 = vmul.f32 %v145, 0.125
    %v147 = vadd.f32 %v98, %v146
    %vm148 = vcmp.lt.f32.partialorder %v107, %v115
    %vm149 = vmxor %vm69, %vm106
    %v150 = vsel %vm149, 1, 0
    %v151 = vcvt.s32.f32 %v150
    %v152 = vmul.f32 %v151, 0.125
    %v153 = vadd.f32 %v147, %v152
    %vm154 = vmxor %vm69, %vm148
    %v155 = vsel %vm154, 1, 0
    %v156 = vcvt.s32.f32 %v155
    %v157 = vmul.f32 %v156, 0.125
    %v158 = vadd.f32 %v153, %v157
    %v159 = vlaneseq
    %v160 = vand.u32 %v159, 127
    %s161 = smul.u32 0, 128
    %s162 = ssub.s32 8, %s161
    %v163 = vstv %s162
    %vm164 = vcmp.lt.s32.totalorder %v160, %v163
    %v165 = vsel %vm164, 1, 0
    %v166 = vcvt.s32.f32 %v165
    %v167 = vmul.f32 %v158, %v166
    %168 = vst [vmem:[#allocation7] sm:$0x1] %v167
    // Predicated region
    $region34: #{tpu_custom_call.1} parent=1 // pred_check
      _
    $region35: #{tpu_custom_call.1} parent=1 // pred_check_branch
      %170 = sbr.rel (0) target = $region37
    $region36: #{tpu_custom_call.1} parent=1 // pred_region
      %s172 = ssub.s32 16, 16
      %173 = vsyncadd [#allocation4], %s172
      %s175 = sshll.u32 [#allocation7], 4
      %s176 = int_to_ptr.vmem [resolvable:$true] %s175
      %178 = dma.vmem_to_hbm [thread:$0]  %s176, 16, %s6, [#allocation4]
    $region37: #{tpu_custom_call.1} parent=1 // pred_fallthru
      _
    // Predicated region
    $region38: #{tpu_custom_call.1} parent=1 // pred_check
      _
    $region39: #{tpu_custom_call.1} parent=1 // pred_check_branch
      %180 = sbr.rel (0) target = $region41
    $region40: #{tpu_custom_call.1} parent=1 // pred_region
      %181 = dma.done [#allocation4], 16
    $region41: #{tpu_custom_call.1} parent=1 // pred_fallthru
      _
    %182 = vsyncpa [#allocation3], 1
    %183 = vsyncpa [#allocation6], 1
    %184 = vsyncpa [#allocation4], 1

</llo_original>
